<compile_context>
chip_gen: v7x
topology: tpu7x:2x2x1
jax: 0.10.0
libtpu: 0.0.40
codegen_flags: <defaults>
</compile_context>

<pallas_src>
import jax
import jax.numpy as jnp
from jax.experimental import pallas as pl
from jax.experimental.pallas import tpu as pltpu


def _norm_kernel(s_ref, x_ref, o_ref):
    # s_ref: (1, 1) f32 scalar in SMEM; x_ref / o_ref: (TB, D) tile in VMEM.
    x = x_ref[...]
    xf = x.astype(jnp.float32)                         # no-op for f32 inputs
    # Sum of squares over the feature axis (dim=1), accumulated in f32 (XLU reduce).
    sumsq = jnp.sum(xf * xf, axis=1, keepdims=True)    # (TB, 1)
    # Fold the learnable scale into the per-row rsqrt (EUP op on a (TB, 1) slab),
    # leaving a single full-tile broadcast-multiply on the VPU.
    inv = s_ref[0, 0] * jax.lax.rsqrt(sumsq)           # (TB, 1) f32
    # NOTE: matches torch semantics exactly — an all-zero row yields inf/NaN
    # (torch.norm division adds no eps either).
    o_ref[...] = (xf * inv).astype(o_ref.dtype)


def _sublane(dtype):
    itemsize = jnp.dtype(dtype).itemsize
    return max(8, 32 // itemsize)   # 8 for f32, 16 for bf16, 32 for int8/fp8


def _pick_tile_b(B, D, dtype, tile_budget_bytes=32 * 1024 * 1024):
    """Largest row tile such that double-buffered in+out tiles fit the budget.

    The budget is kept <= 32 MiB so the same config fits v7x's 64 MiB physical
    VMEM as well as v5e/v6e (with the raised scoped limit below).
    """
    itemsize = jnp.dtype(dtype).itemsize
    gran = _sublane(dtype)
    # input + output, each double-buffered -> 4 resident (tile_b, D) tiles.
    t = tile_budget_bytes // (4 * D * itemsize)
    t = max(gran, (t // gran) * gran)
    b_up = pl.cdiv(B, gran) * gran
    t = min(t, b_up)
    # If the whole batch would collapse into one tile, split it so the megacore
    # "parallel" axis has at least two tiles to hand out.
    if t == b_up and b_up >= 2 * gran:
        t = max(gran, pl.cdiv(b_up // 2, gran) * gran)
    return t


def normalization_layer(x, norm_s, *, tile_b=None):
    """features = norm_s * x / ||x||_2 (L2 norm over dim=1, keepdim broadcast)."""
    B, D = x.shape
    if tile_b is None:
        tile_b = _pick_tile_b(B, D, x.dtype)
    grid_b = pl.cdiv(B, tile_b)          # tail tile handled by Pallas write-masking
    s = jnp.asarray(norm_s, jnp.float32).reshape(1, 1)

    # TODO(synk): for astronomically wide D (a single (sublane, D) tile overflowing
    # VMEM) add a two-pass D-split reduction; not needed for realistic feature dims.
    return pl.pallas_call(
        _norm_kernel,
        out_shape=jax.ShapeDtypeStruct((B, D), x.dtype),
        grid_spec=pltpu.PrefetchScalarGridSpec(
            num_scalar_prefetch=0,
            grid=(grid_b,),
            in_specs=[
                pl.BlockSpec(memory_space=pltpu.MemorySpace.SMEM),  # norm_s scalar
                pl.BlockSpec((tile_b, D), lambda i: (i, 0)),        # x row tile
            ],
            out_specs=pl.BlockSpec((tile_b, D), lambda i: (i, 0)),
        ),
        compiler_params=pltpu.CompilerParams(
            dimension_semantics=("parallel",),
            vmem_limit_bytes=48 * 1024 * 1024,   # allow the double-buffered big tiles
        ),
    )(s, x)


if __name__ == "__main__":
    key = jax.random.PRNGKey(0)
    norm_s = 4.0   # learn_scale=True -> single learnable scalar, init value 4.0

    # Case 1: small, evenly tiled batch.
    B, D = 16, 128
    x = jax.random.normal(key, (B, D), dtype=jnp.float32)
    out = jax.block_until_ready(normalization_layer(x, norm_s))
    ref = norm_s * x / jnp.linalg.norm(x, axis=1, keepdims=True)
    assert out.shape == x.shape
    assert jnp.allclose(out, ref, atol=1e-5, rtol=1e-5)

    # Case 2: batch not divisible by the tile -> exercises the masked tail tile.
    B2, D2 = 13, 256
    x2 = jax.random.normal(jax.random.PRNGKey(1), (B2, D2), dtype=jnp.float32)
    out2 = jax.block_until_ready(normalization_layer(x2, norm_s, tile_b=8))
    ref2 = norm_s * x2 / jnp.linalg.norm(x2, axis=1, keepdims=True)
    assert out2.shape == x2.shape
    assert jnp.allclose(out2, ref2, atol=1e-5, rtol=1e-5)

    # Case 3: bf16 input path (upcast reduce in f32, bf16 lane-dense stores).
    B3, D3 = 24, 128
    x3 = jax.random.normal(jax.random.PRNGKey(2), (B3, D3), dtype=jnp.bfloat16)
    out3 = jax.block_until_ready(normalization_layer(x3, norm_s))
    x3f = x3.astype(jnp.float32)
    ref3 = (norm_s * x3f / jnp.linalg.norm(x3f, axis=1, keepdims=True)).astype(jnp.bfloat16)
    assert out3.shape == x3.shape
    assert jnp.allclose(out3.astype(jnp.float32), ref3.astype(jnp.float32),
                        atol=2e-2, rtol=2e-2)

    print("KERNEL_OK")
</pallas_src>

<mosaic_0001>
module attributes {stable_mosaic.version = 11 : i64} {
  func.func @_norm_kernel(%arg0: i32, %arg1: memref<1x1xf32, #tpu.memory_space<smem>>, %arg2: memref<8x128xf32, #tpu.memory_space<vmem>>, %arg3: memref<8x128xf32, #tpu.memory_space<vmem>>) attributes {dimension_semantics = [#tpu.dimension_semantics<parallel>], iteration_bounds = array<i64: 2>, scalar_prefetch = 0 : i64, scratch_operands = 0 : i64, tpu.core_type = #tpu.core_type<tc>, window_params = [{transform_indices = @transform_0, window_bounds = array<i64: 1, 1>}, {transform_indices = @transform_1, window_bounds = array<i64: 8, 128>}, {transform_indices = @transform_2, window_bounds = array<i64: 8, 128>}]} {
    %c0 = arith.constant 0 : index
    %c0_0 = arith.constant 0 : index
    %0 = vector.load %arg2[%c0, %c0_0] : memref<8x128xf32, #tpu.memory_space<vmem>>, vector<8x128xf32>
    %1 = arith.mulf %0, %0 : vector<8x128xf32>
    %cst = arith.constant dense<0.000000e+00> : vector<8xf32>
    %2 = vector.multi_reduction <add>, %1, %cst [1] : vector<8x128xf32> to vector<8xf32>
    %3 = vector.shape_cast %2 : vector<8xf32> to vector<8x1xf32>
    %c0_1 = arith.constant 0 : index
    %c0_2 = arith.constant 0 : index
    %4 = memref.load %arg1[%c0_1, %c0_2] : memref<1x1xf32, #tpu.memory_space<smem>>
    %5 = math.rsqrt %3 : vector<8x1xf32>
    %6 = vector.broadcast %4 : f32 to vector<8x1xf32>
    %7 = arith.mulf %6, %5 : vector<8x1xf32>
    %8 = vector.broadcast %7 : vector<8x1xf32> to vector<8x128xf32>
    %9 = arith.mulf %0, %8 : vector<8x128xf32>
    %c0_3 = arith.constant 0 : index
    %c0_4 = arith.constant 0 : index
    %10 = vector.load %arg3[%c0_3, %c0_4] : memref<8x128xf32, #tpu.memory_space<vmem>>, vector<8x128xf32>
    tpu.vector_store %arg3[%c0_3, %c0_4], %9 {strides = array<i32>} : memref<8x128xf32, #tpu.memory_space<vmem>>, vector<8x128xf32>,
    return
  }
  func.func @transform_0(%arg0: i32) -> (i32, i32) {
    %c0_i32 = arith.constant 0 : i32
    %c0_i32_0 = arith.constant 0 : i32
    %c0_i32_1 = arith.constant 0 : i32
    return %c0_i32, %c0_i32_0 : i32, i32
  }
  func.func @transform_1(%arg0: i32) -> (i32, i32) {
    %c0_i32 = arith.constant 0 : i32
    %c0_i32_0 = arith.constant 0 : i32
    return %arg0, %c0_i32 : i32, i32
  }
  func.func @transform_2(%arg0: i32) -> (i32, i32) {
    %c0_i32 = arith.constant 0 : i32
    %c0_i32_0 = arith.constant 0 : i32
    return %arg0, %c0_i32 : i32, i32
  }
}

</mosaic_0001>

<llo_original>
// kernel: tpu_custom_call.1
$region0: #{tpu_custom_call.1}
  #allocation0 [shape = 'u32[]', space=smem, size = 0x4, offset = 0x4, fixed_abs, tag = 'smem constant byte address 0x4 - core index']
  #allocation1 [shape = 'u32[144,128]{1,0:T(1,128)}', space=vmem, size = 0x12000, scoped, tag = 'internal scratch']
  #allocation2 [shape = 'f32[1,1]{1,0:T(1,128)S(6)}', space=smem, size = 0x200, scoped, tag = 'scoped memory for tpu_custom_call.1']
  %s0 = inlined_call_operand.<no memory space> [shape: f32[1,1], index: 0, kind: input, shape index: {}]
  %s1 = inlined_call_operand.hbm [shape: f32[16,128], index: 1, kind: input, shape index: {}]
  %s2 = inlined_call_operand.hbm [shape: f32[16,128], index: 2, kind: output, shape index: {}]
  %s3 = sld [smem:[#allocation0]]
  $region45: #{tpu_custom_call.1} parent=0
    _
  %s5 = ssub.s32 1, %s3
  %s6 = scalar_select 0, %s5, %s3
  %7 = sst [smem:[#allocation2]] %s0
  $region1: #{tpu_custom_call.1} parent=0
    #allocation3 [shape = 'u8[8192]{0}', space=vmem, size = 0x2000, scoped, tag = 'input window, operand 1']
    #allocation4 [shape = 's32[2]{0}', space=sflag, size = 0x8, scoped, tag = 'scoped memory for tpu_custom_call.1']
    #allocation5 [shape = 's32[2]{0}', space=sflag, size = 0x8, scoped, tag = 'scoped memory for tpu_custom_call.1']
    #allocation6 [shape = 'u8[8192]{0}', space=vmem, size = 0x2000, scoped, tag = 'output window, operand 0']
    %8 = vsyncpa [#allocation4], 0
    %s9 = scalar_lea.sflag [#allocation4], 1
    %10 = vsyncpa %s9, 0
    %11 = vsyncpa [#allocation5], 0
    %s12 = scalar_lea.sflag [#allocation5], 1
    %13 = vsyncpa %s12, 0
    loop: start=0, step=1, limit=4
    $region2: #{tpu_custom_call.1} parent=1 // loop_pre_header
      _
    $region3: #{tpu_custom_call.1} parent=1 // loop_header
      %s15 = sphi 0, %s19
      %p16 = scmp.ge.s32.totalorder %s15, 4
      %s23 = sphi 0, %s23
      %s25 = sphi 0, %s23
      %s26 = sphi 0, %s25
      %s40 = sphi 0, %s26
      %s46 = sphi 0, %s48
      %s49 = sphi 0, %s46
      %s50 = sphi 0, %s49
      %s66 = sphi 0, %s50
      %s72 = sphi 0, %s74
      %s75 = sphi 0, %s72
      %s76 = sphi 0, %s75
      %s92 = sphi 0, %s76
    $region4: #{tpu_custom_call.1} parent=1 // loop_header_branch
      %18 = sbr.rel (%p16) target = $region8
    $region5: #{tpu_custom_call.1} parent=1 // loop_body
      %s20 = ssub.s32 %s15, 1
      %s21 = ssub.s32 %s15, 2
      %s22 = sadd.s32 %s15, 1
      %s24 = sadd.s32 %s23, 1
      %p27 = scmp.eq.s32.totalorder %s15, 1
      %p28 = scmp.ne.s32.totalorder %s23, %s25
      %p29 = scmp.eq.s32.totalorder %s15, 0
      %p30 = por %p28, %p29
      %p31 = scmp.ne.s32.totalorder %s23, %s25
      %p32 = scmp.eq.s32.totalorder %s20, 1
      %p33 = por %p31, %p32
      %p34 = scmp.ne.s32.totalorder %s25, %s26
      %p35 = scmp.eq.s32.totalorder %s20, 0
      %p36 = por %p34, %p35
      %p37 = scmp.ne.s32.totalorder %s25, %s26
      %p38 = scmp.eq.s32.totalorder %s21, 1
      %p39 = por %p37, %p38
      %p41 = scmp.ne.s32.totalorder %s26, %s40
      %p42 = scmp.eq.s32.totalorder %s21, 0
      %p43 = por %p41, %p42
      %s44 = ssub.s32 %s15, %s22
      %p45 = scmp.eq.s32.totalorder %s44, 0
      %s47 = sadd.s32 %s46, 1
      %s48 = scalar_select %p45, %s46, %s47
      %p51 = pneg %p45
      %p52 = scmp.eq.s32.totalorder %s15, 1
      %p53 = por %p51, %p52
      %p54 = scmp.ne.s32.totalorder %s46, %s49
      %p55 = scmp.eq.s32.totalorder %s15, 0
      %p56 = por %p54, %p55
      %p57 = scmp.ne.s32.totalorder %s46, %s49
      %p58 = scmp.eq.s32.totalorder %s20, 1
      %p59 = por %p57, %p58
      %p60 = scmp.ne.s32.totalorder %s49, %s50
      %p61 = scmp.eq.s32.totalorder %s20, 0
      %p62 = por %p60, %p61
      %p63 = scmp.ne.s32.totalorder %s49, %s50
      %p64 = scmp.eq.s32.totalorder %s21, 1
      %p65 = por %p63, %p64
      %p67 = scmp.ne.s32.totalorder %s50, %s66
      %p68 = scmp.eq.s32.totalorder %s21, 0
      %p69 = por %p67, %p68
      %s70 = ssub.s32 %s15, %s22
      %p71 = scmp.eq.s32.totalorder %s70, 0
      %s73 = sadd.s32 %s72, 1
      %s74 = scalar_select %p71, %s72, %s73
      %p77 = pneg %p71
      %p78 = scmp.eq.s32.totalorder %s15, 1
      %p79 = por %p77, %p78
      %p80 = scmp.ne.s32.totalorder %s72, %s75
      %p81 = scmp.eq.s32.totalorder %s15, 0
      %p82 = por %p80, %p81
      %p83 = scmp.ne.s32.totalorder %s72, %s75
      %p84 = scmp.eq.s32.totalorder %s20, 1
      %p85 = por %p83, %p84
      %p86 = scmp.ne.s32.totalorder %s75, %s76
      %p87 = scmp.eq.s32.totalorder %s20, 0
      %p88 = por %p86, %p87
      %p89 = scmp.ne.s32.totalorder %s75, %s76
      %p90 = scmp.eq.s32.totalorder %s21, 1
      %p91 = por %p89, %p90
      %p93 = scmp.ne.s32.totalorder %s76, %s92
      %p94 = scmp.eq.s32.totalorder %s21, 0
      %p95 = por %p93, %p94
      %p96 = scmp.le.s32.totalorder 1, %s15
      %p97 = scmp.lt.s32.totalorder %s15, 3
      %p98 = pnand %p96, %p97
      %p99 = pneg %p98
      // Predicated region
      $region9: #{tpu_custom_call.1} parent=5 // pred_check
        _
      $region10: #{tpu_custom_call.1} parent=5 // pred_check_branch
        %101 = sbr.rel (%p98) target = $region12
      $region11: #{tpu_custom_call.1} parent=5 // pred_region
        %s102 = ssub.s32 %s15, 1
        // Predicated region
        $region13: #{tpu_custom_call.1} parent=11 // pred_check
          %p103 = pneg %p36
        $region14: #{tpu_custom_call.1} parent=11 // pred_check_branch
          %105 = sbr.rel (%p103) target = $region16
        $region15: #{tpu_custom_call.1} parent=11 // pred_region
          _
        $region16: #{tpu_custom_call.1} parent=11 // pred_fallthru
          _
      $region12: #{tpu_custom_call.1} parent=5 // pred_fallthru
        _
      %p106 = scmp.lt.s32.totalorder %s15, 2
      // Predicated region
      $region17: #{tpu_custom_call.1} parent=5 // pred_check
        %p107 = pneg %p106
      $region18: #{tpu_custom_call.1} parent=5 // pred_check_branch
        %109 = sbr.rel (%p107) target = $region20
      $region19: #{tpu_custom_call.1} parent=5 // pred_region
        // Predicated region
        $region21: #{tpu_custom_call.1} parent=19 // pred_check
          %p110 = pneg %p56
        $region22: #{tpu_custom_call.1} parent=19 // pred_check_branch
          %112 = sbr.rel (%p110) target = $region24
        $region23: #{tpu_custom_call.1} parent=19 // pred_region
          %s113 = sand.u32 %s46, 1
          %s114 = scalar_lea.sflag [#allocation4], %s113
          %s115 = sand.u32 %s46, 1
          %s116 = smul.addr %s115, 8
          %s117 = scalar_lea.vmem [#allocation3], %s116
          %s119 = ssub.s32 128, 128
          %120 = vsyncadd %s114, %s119
          %s121 = smul.addr %s15, 128
          %s122 = scalar_lea.hbm %s1, %s121
          %s124 = sshll.u32 %s117, 4
          %s125 = int_to_ptr.vmem [resolvable:$true] %s124
          %127 = dma.hbm_to_vmem [thread:$0]  %s122, 128, %s125, %s114
        $region24: #{tpu_custom_call.1} parent=19 // pred_fallthru
          _
      $region20: #{tpu_custom_call.1} parent=5 // pred_fallthru
        _
      %p128 = scmp.le.s32.totalorder 1, %s15
      %p129 = scmp.lt.s32.totalorder %s15, 3
      %p130 = pnand %p128, %p129
      %p131 = pneg %p130
      // Predicated region
      $region25: #{tpu_custom_call.1} parent=5 // pred_check
        _
      $region26: #{tpu_custom_call.1} parent=5 // pred_check_branch
        %133 = sbr.rel (%p130) target = $region28
      $region27: #{tpu_custom_call.1} parent=5 // pred_region
        %s134 = ssub.s32 %s15, 1
        %s135 = sand.u32 %s49, 1
        %s136 = scalar_lea.sflag [#allocation4], %s135
        %s137 = sand.u32 %s49, 1
        %s138 = smul.addr %s137, 8
        %s139 = scalar_lea.vmem [#allocation3], %s138
        // Predicated region
        $region29: #{tpu_custom_call.1} parent=27 // pred_check
          %p140 = pneg %p62
        $region30: #{tpu_custom_call.1} parent=27 // pred_check_branch
          %142 = sbr.rel (%p140) target = $region32
        $region31: #{tpu_custom_call.1} parent=27 // pred_region
          %143 = dma.done %s136, 128
        $region32: #{tpu_custom_call.1} parent=27 // pred_fallthru
          _
        %p144 = pneg %p36
        %p145 = pneg %p33
        %s146 = sand.u32 %s49, 1
        %s147 = scalar_lea.sflag [#allocation4], %s146
        %s148 = sand.u32 %s49, 1
        %s149 = smul.addr %s148, 8
        %s150 = scalar_lea.vmem [#allocation3], %s149
        %p151 = pneg %p62
        %p152 = pneg %p59
        %p153 = pneg %p88
        %p154 = pneg %p85
        %s155 = sand.u32 %s75, 1
        %s156 = scalar_lea.sflag [#allocation5], %s155
        %s157 = sand.u32 %s75, 1
        %s158 = smul.addr %s157, 8
        %s159 = scalar_lea.vmem [#allocation6], %s158
        %v160 = vld [vmem:[%s139] sm:$0xff]
        %v161 = vmul.f32 %v160, %v160
        %162 = vadd.xlane.f32.xlu0 %v161
        %v163 = vpop.xlane.xlu0 %162
        %s164 = sld [smem:[#allocation2]]
        %v165 = vrsqrt.pop %v163
        %v166 = vstv %s164
        %v167 = vmul.f32 %v166, %v165
        %v168 = vmul.f32 %v160, %v167
        %169 = vst [vmem:[%s159] sm:$0xff] %v168
        %s170 = sand.u32 %s75, 1
        %s171 = scalar_lea.sflag [#allocation5], %s170
        %s172 = sand.u32 %s75, 1
        %s173 = smul.addr %s172, 8
        %s174 = scalar_lea.vmem [#allocation6], %s173
        // Predicated region
        $region33: #{tpu_custom_call.1} parent=27 // pred_check
          %p175 = pneg %p85
        $region34: #{tpu_custom_call.1} parent=27 // pred_check_branch
          %177 = sbr.rel (%p175) target = $region36
        $region35: #{tpu_custom_call.1} parent=27 // pred_region
          %s179 = ssub.s32 128, 128
          %180 = vsyncadd %s171, %s179
          %s181 = smul.addr %s20, 128
          %s182 = scalar_lea.hbm %s2, %s181
          %s184 = sshll.u32 %s174, 4
          %s185 = int_to_ptr.vmem [resolvable:$true] %s184
          %187 = dma.vmem_to_hbm [thread:$0]  %s185, 128, %s182, %s171
        $region36: #{tpu_custom_call.1} parent=27 // pred_fallthru
          _
      $region28: #{tpu_custom_call.1} parent=5 // pred_fallthru
        _
      %p188 = scmp.le.s32.totalorder 2, %s15
      // Predicated region
      $region37: #{tpu_custom_call.1} parent=5 // pred_check
        %p189 = pneg %p188
      $region38: #{tpu_custom_call.1} parent=5 // pred_check_branch
        %191 = sbr.rel (%p189) target = $region40
      $region39: #{tpu_custom_call.1} parent=5 // pred_region
        %s192 = ssub.s32 %s15, 2
        // Predicated region
        $region41: #{tpu_custom_call.1} parent=39 // pred_check
          %p193 = pneg %p91
        $region42: #{tpu_custom_call.1} parent=39 // pred_check_branch
          %195 = sbr.rel (%p193) target = $region44
        $region43: #{tpu_custom_call.1} parent=39 // pred_region
          %s196 = sand.u32 %s76, 1
          %s197 = scalar_lea.sflag [#allocation5], %s196
          %s198 = sand.u32 %s76, 1
          %s199 = smul.addr %s198, 8
          %s200 = scalar_lea.vmem [#allocation6], %s199
          %201 = dma.done %s197, 128
        $region44: #{tpu_custom_call.1} parent=39 // pred_fallthru
          _
      $region40: #{tpu_custom_call.1} parent=5 // pred_fallthru
        _
    $region6: #{tpu_custom_call.1} parent=1 // loop_footer
      %s19 = sadd.s32 1, %s15
    $region7: #{tpu_custom_call.1} parent=1 // loop_footer_branch
      %14 = sbr.rel target = $region3
    $region8: #{tpu_custom_call.1} parent=1 // loop_exit
      _
    %202 = vsyncpa [#allocation4], 1
    %s203 = scalar_lea.sflag [#allocation4], 1
    %204 = vsyncpa %s203, 1
    %205 = vsyncpa [#allocation5], 1
    %s206 = scalar_lea.sflag [#allocation5], 1
    %207 = vsyncpa %s206, 1

</llo_original>
